<compile_context>
chip_gen: v6e
topology: v6e:2x2x1
jax: 0.10.0
libtpu: 0.0.40
codegen_flags: <defaults>
</compile_context>

<pallas_src>
import math

import jax
import jax.numpy as jnp
from jax.experimental import pallas as pl
from jax.experimental.pallas import tpu as pltpu

_MAX_LANES = 512        # widest slab (multiple of 128 lanes)
_MAX_BLOCK_ROWS = 512   # <= (512, 512) f32 = 1 MiB per input block
_MIN_BLOCK_ROWS = 64    # floor so tiny blocks don't drown in grid overhead
_TARGET_STEPS = 4       # aim for >= this many grid steps per core-split


# ---------------------------------------------------------------------------
# Chip-aware core split (perf only; correctness never depends on it)
# ---------------------------------------------------------------------------
def _num_core_splits():
    try:
        kind = jax.devices()[0].device_kind.lower()
    except Exception:
        return 1
    # Two TensorCores per chip: v7x / v4 / v5p.  Single TC: v5e / v6e.
    if "v7" in kind or "v4" in kind or "v5p" in kind:
        return 2
    return 1


# ---------------------------------------------------------------------------
# Wrapper-side slab prep: free reshape, never pad, never concatenate
# ---------------------------------------------------------------------------
def _slab_layout(n):
    """Pick (lanes, rows, tail_elems) for a flat length-n array.

    Prefer a lane width in {512, 256, 128} that divides n exactly so the
    reshape is a free bitcast (no copy).  Otherwise the largest 512-lane bulk
    goes through the kernel and the small remainder is reduced wrapper-side.
    """
    for lanes in (512, 256, 128):
        if n >= lanes and n % lanes == 0:
            return lanes, n // lanes, 0
    rows = n // _MAX_LANES
    return _MAX_LANES, rows, n - rows * _MAX_LANES


def _to_slab(x):
    """Lane-dense (rows, lanes) slab + leftover tail.  Native dtype, no pad."""
    flat = jnp.ravel(x)
    n = flat.shape[0]
    lanes, rows, tail_n = _slab_layout(n)
    slab = None
    if rows > 0:
        bulk = flat if tail_n == 0 else flat[: rows * lanes]
        slab = bulk.reshape(rows, lanes)
    tail = flat[rows * lanes:] if tail_n > 0 else None
    return slab, rows, lanes, tail


def _row_align(dtype):
    # sub-32-bit dtypes pack along sublanes -> 16-row block alignment
    return 8 if jnp.dtype(dtype).itemsize >= 4 else 16


def _block_meta(rows, dtype, splits):
    """block_rows / nblocks sized so each core-split gets several pipelined
    grid steps while a block stays <= ~1 MiB."""
    align = _row_align(dtype)
    if rows <= max(_MIN_BLOCK_ROWS, align):
        return rows, 1                         # single full-extent block
    target = rows // (splits * _TARGET_STEPS)
    br = max(_MIN_BLOCK_ROWS, (target // align) * align)
    br = min(_MAX_BLOCK_ROWS, (br // align) * align)
    nblk = -(-rows // br)
    return br, nblk


# ---------------------------------------------------------------------------
# Fused reduction: one pallas_call -> (sum((clip(xhat)-tgt)^2), sum(log(lik)))
# ---------------------------------------------------------------------------
def _fused_reduce(lik_slabs, sse_pair):
    """lik_slabs: list of (slab, rows, lanes).
    sse_pair: None or ((xhat_slab, tgt_slab), rows, lanes)."""
    with_sse = sse_pair is not None
    splits = _num_core_splits()

    lik_meta = []                               # (brows, nblk, rows, lanes, ragged)
    for slab, rows, lanes in lik_slabs:
        brows, nblk = _block_meta(rows, slab.dtype, splits)
        lik_meta.append((brows, nblk, rows, lanes, (rows % brows) != 0))

    if with_sse:
        (xhat_slab, tgt_slab), sse_rows, sse_lanes = sse_pair
        sse_brows, sse_nblk = _block_meta(sse_rows, xhat_slab.dtype, splits)
        sse_ragged = (sse_rows % sse_brows) != 0
    else:
        sse_nblk = 0

    total_blocks = max([m[1] for m in lik_meta] + ([sse_nblk] if with_sse else []))
    steps = -(-total_blocks // splits)
    n_lik = len(lik_slabs)

    def kernel(*refs):
        pos = 0
        if with_sse:
            xhat_ref, tgt_ref = refs[0], refs[1]
            pos = 2
        lik_refs = refs[pos:pos + n_lik]
        out_ref = refs[pos + n_lik]
        scratch = refs[pos + n_lik + 1:]
        acc_sse = scratch[0] if with_sse else None
        acc_log = scratch[-1]

        if splits > 1:
            c = pl.program_id(0)                # core-split ("parallel")
            i = pl.program_id(1)                # reduction step ("arbitrary")
        else:
            c = 0
            i = pl.program_id(0)
        g = c * steps + i                       # global block index

        @pl.when(i == 0)
        def _init():
            acc_log[...] = jnp.zeros_like(acc_log)
            if with_sse:
                acc_sse[...] = jnp.zeros_like(acc_sse)

        def partial8(x):
            """Reduce an (r, l) f32 block to an (8, l) partial.

            When r is a multiple of 8 the reshape splits exactly on the
            (8, 128) tile boundary, so the reduce is pure vreg VALU adds."""
            r, l = x.shape
            if r >= 8 and r % 8 == 0:
                return x.reshape(r // 8, 8, l).sum(axis=0)
            s = x if r == 1 else jnp.sum(x, axis=0, keepdims=True)
            rid = jax.lax.broadcasted_iota(jnp.int32, (8, l), 0)
            return jnp.where(rid == 0, s, 0.0)

        if with_sse:
            @pl.when(g < sse_nblk)
            def _sse():
                x = jnp.clip(xhat_ref[...].astype(jnp.float32), 0.0, 1.0)
                d = x - tgt_ref[...].astype(jnp.float32)
                if sse_ragged:
                    rid = g * sse_brows + jax.lax.broadcasted_iota(
                        jnp.int32, d.shape, 0)
                    d = jnp.where(rid < sse_rows, d, 0.0)   # mask INPUT
                p = partial8(d * d)
                acc_sse[:, :sse_lanes] = acc_sse[:, :sse_lanes] + p

        def make_log_body(lik_ref, brows, nblk, rows, lanes, ragged):
            @pl.when(g < nblk)
            def _log():
                x = lik_ref[...].astype(jnp.float32)
                if ragged:
                    rid = g * brows + jax.lax.broadcasted_iota(
                        jnp.int32, x.shape, 0)
                    x = jnp.where(rid < rows, x, 1.0)       # log(1) = 0
                p = partial8(jnp.log(x))
                acc_log[:, :lanes] = acc_log[:, :lanes] + p

        for k in range(n_lik):
            brows, nblk, rows, lanes, ragged = lik_meta[k]
            make_log_body(lik_refs[k], brows, nblk, rows, lanes, ragged)

        @pl.when(i == steps - 1)
        def _finish():
            # One small cross-lane reduce per core + lane-dense (1,128) store.
            log_val = jnp.sum(acc_log[...])
            sse_val = jnp.sum(acc_sse[...]) if with_sse else jnp.float32(0.0)
            lane = jax.lax.broadcasted_iota(jnp.int32, (1, 128), 1)
            out_ref[...] = jnp.where(lane == 0, sse_val,
                                     jnp.where(lane == 1, log_val, 0.0))

    def clamped_map(nblk):
        # Steps past this operand's last block just re-target it (DMA elided
        # for repeated block indices; compute is pl.when'd off).
        if splits > 1:
            return lambda c, i: (jnp.minimum(c * steps + i, nblk - 1), 0)
        return lambda i: (jnp.minimum(i, nblk - 1), 0)

    in_specs, operands = [], []
    if with_sse:
        spec = pl.BlockSpec((sse_brows, sse_lanes), clamped_map(sse_nblk))
        in_specs += [spec, spec]
        operands += [xhat_slab, tgt_slab]
    for (slab, _rows, lanes), (brows, nblk, _, _, _) in zip(lik_slabs, lik_meta):
        in_specs.append(pl.BlockSpec((brows, lanes), clamped_map(nblk)))
        operands.append(slab)

    scratch_shapes = []
    if with_sse:
        scratch_shapes.append(pltpu.VMEM((8, _MAX_LANES), jnp.float32))
    scratch_shapes.append(pltpu.VMEM((8, _MAX_LANES), jnp.float32))

    if splits > 1:
        grid = (splits, steps)
        dims = ("parallel", "arbitrary")
        out_map = lambda c, i: (0, c)
    else:
        grid = (steps,)
        dims = ("arbitrary",)
        out_map = lambda i: (0, 0)

    lik_elems = sum(r * l for _, r, l in lik_slabs)
    sse_elems = sse_pair[1] * sse_pair[2] if with_sse else 0
    bytes_accessed = sum(int(op.size) * op.dtype.itemsize for op in operands) \
        + splits * 128 * 4
    cost = pl.CostEstimate(flops=int(4 * sse_elems + 2 * lik_elems),
                           transcendentals=int(lik_elems),
                           bytes_accessed=int(bytes_accessed))

    out = pl.pallas_call(
        kernel,
        out_shape=jax.ShapeDtypeStruct((1, splits * 128), jnp.float32),
        grid_spec=pltpu.PrefetchScalarGridSpec(
            num_scalar_prefetch=0,
            grid=grid,
            in_specs=in_specs,
            out_specs=pl.BlockSpec((1, 128), out_map),
            scratch_shapes=scratch_shapes),
        compiler_params=pltpu.CompilerParams(
            dimension_semantics=dims,
            vmem_limit_bytes=32 * 1024 * 1024),
        cost_estimate=cost,
    )(*operands)

    parts = out.reshape(splits, 128)
    return jnp.sum(parts[:, 0]), jnp.sum(parts[:, 1])


# ---------------------------------------------------------------------------
# RateDistortionLoss.forward
# ---------------------------------------------------------------------------
def rate_distortion_loss(output, target):
    """Matches RateDistortionLoss.forward: bpp_loss (+ mse_loss, psnr)."""
    N, _, H, W = target.shape
    num_pixels = N * H * W

    # Per-tensor slab prep: free reshape, no concat, no pad.
    lik_slabs = []
    tail_log = jnp.float32(0.0)
    for lik in output['likelihoods'].values():
        slab, rows, lanes, tail = _to_slab(lik)
        if slab is not None:
            lik_slabs.append((slab, rows, lanes))
        if tail is not None:     # <512 leftover elems: tiny wrapper-side reduce
            tail_log = tail_log + jnp.sum(jnp.log(tail.astype(jnp.float32)))

    x_hat = output['x_hat']
    with_sse = x_hat is not None
    sse_pair = None
    tail_sse = jnp.float32(0.0)
    if with_sse:
        xh_slab, rows, lanes, xh_tail = _to_slab(x_hat)
        tg_slab, _, _, tg_tail = _to_slab(target)
        if xh_slab is not None:
            sse_pair = ((xh_slab, tg_slab), rows, lanes)
        if xh_tail is not None:
            dt = (jnp.clip(xh_tail.astype(jnp.float32), 0.0, 1.0)
                  - tg_tail.astype(jnp.float32))
            tail_sse = tail_sse + jnp.sum(dt * dt)

    if lik_slabs or sse_pair is not None:
        sse_sum, log_sum = _fused_reduce(lik_slabs, sse_pair)
    else:
        sse_sum, log_sum = jnp.float32(0.0), jnp.float32(0.0)
    sse_sum = sse_sum + tail_sse
    log_sum = log_sum + tail_log

    out = {}
    if with_sse:
        mse = sse_sum / jnp.float32(math.prod(target.shape))
        out['mse_loss'] = mse
        out['psnr'] = jnp.where(mse == 0, jnp.float32(100.0),
                                10.0 * jnp.log10(1.0 / mse))
    out['bpp_loss'] = log_sum / (-math.log(2) * num_pixels)
    return out


# ---------------------------------------------------------------------------
# Self-test
# ---------------------------------------------------------------------------
def _reference(x_hat, target, liks, num_pixels):
    ref = {}
    ref['bpp_loss'] = sum(jnp.sum(jnp.log(l)) for l in liks) / (
        -math.log(2) * num_pixels)
    if x_hat is not None:
        clamped = jnp.clip(x_hat, 0.0, 1.0)
        mse = jnp.mean((clamped - target) ** 2)
        ref['mse_loss'] = mse
        ref['psnr'] = 10.0 * jnp.log10(1.0 / mse)
    return ref


if __name__ == "__main__":
    loss_fn = jax.jit(rate_distortion_loss)

    # ---- case 1: small shapes; exercises 512- and 256-lane slabs plus a
    #      tensor too small/ragged for a slab (tail-only path) ----
    key = jax.random.PRNGKey(0)
    k1, k2, k3, k4, k5 = jax.random.split(key, 5)
    N, C, H, W = 2, 3, 16, 16
    target = jax.random.uniform(k1, (N, C, H, W), dtype=jnp.float32)
    x_hat = target + 0.05 * jax.random.normal(k2, (N, C, H, W),
                                              dtype=jnp.float32)
    lik_y = jax.random.uniform(k3, (N, 8, 8, 8), dtype=jnp.float32,
                               minval=0.05, maxval=1.0)      # 1024 elems
    lik_z = jax.random.uniform(k4, (N, 8, 4, 4), dtype=jnp.float32,
                               minval=0.05, maxval=1.0)      # 256 elems
    lik_w = jax.random.uniform(k5, (N, 5, 3, 3), dtype=jnp.float32,
                               minval=0.05, maxval=1.0)      # 90 elems (tail)

    res = loss_fn({'likelihoods': {'y': lik_y, 'z': lik_z, 'w': lik_w},
                   'x_hat': x_hat}, target)
    res = jax.tree_util.tree_map(jax.block_until_ready, res)
    ref = _reference(x_hat, target, [lik_y, lik_z, lik_w], N * H * W)
    assert jnp.allclose(res['bpp_loss'], ref['bpp_loss'], rtol=1e-4, atol=1e-5)
    assert jnp.allclose(res['mse_loss'], ref['mse_loss'], rtol=1e-4, atol=1e-6)
    assert jnp.allclose(res['psnr'], ref['psnr'], rtol=1e-4, atol=1e-3)

    # x_hat = None (bpp-only) path
    res_b = loss_fn({'likelihoods': {'y': lik_y, 'z': lik_z, 'w': lik_w},
                     'x_hat': None}, target)
    jax.block_until_ready(res_b['bpp_loss'])
    assert jnp.allclose(res_b['bpp_loss'], ref['bpp_loss'],
                        rtol=1e-4, atol=1e-5)

    # ---- case 2: larger image -> multi-block grid, adaptive block rows,
    #      ragged-last-block masking, clamped index maps, core splits ----
    k6, k7, k8 = jax.random.split(jax.random.PRNGKey(1), 3)
    N2, C2, H2, W2 = 2, 3, 224, 224
    target2 = jax.random.uniform(k6, (N2, C2, H2, W2), dtype=jnp.float32)
    x_hat2 = target2 + 0.05 * jax.random.normal(k7, (N2, C2, H2, W2),
                                                dtype=jnp.float32)
    lik2 = jax.random.uniform(k8, (N2, 192, 14, 14), dtype=jnp.float32,
                              minval=0.05, maxval=1.0)

    res2 = loss_fn({'likelihoods': {'y': lik2}, 'x_hat': x_hat2}, target2)
    res2 = jax.tree_util.tree_map(jax.block_until_ready, res2)
    ref2 = _reference(x_hat2, target2, [lik2], N2 * H2 * W2)
    assert jnp.allclose(res2['bpp_loss'], ref2['bpp_loss'],
                        rtol=1e-4, atol=1e-4)
    assert jnp.allclose(res2['mse_loss'], ref2['mse_loss'],
                        rtol=1e-4, atol=1e-6)
    assert jnp.allclose(res2['psnr'], ref2['psnr'], rtol=1e-4, atol=1e-3)

    print("KERNEL_OK")
</pallas_src>

<mosaic_0001>
module attributes {stable_mosaic.version = 11 : i64} {
  func.func @kernel(%arg0: i32, %arg1: memref<3x512xf32, #tpu.memory_space<vmem>>, %arg2: memref<3x512xf32, #tpu.memory_space<vmem>>, %arg3: memref<2x512xf32, #tpu.memory_space<vmem>>, %arg4: memref<1x256xf32, #tpu.memory_space<vmem>>, %arg5: memref<1x128xf32, #tpu.memory_space<vmem>>, %arg6: memref<8x512xf32, #tpu.memory_space<vmem>>, %arg7: memref<8x512xf32, #tpu.memory_space<vmem>>) attributes {dimension_semantics = [#tpu.dimension_semantics<arbitrary>], iteration_bounds = array<i64: 1>, scalar_prefetch = 0 : i64, scratch_operands = 2 : i64, tpu.core_type = #tpu.core_type<tc>, window_params = [{transform_indices = @transform_0, window_bounds = array<i64: 3, 512>}, {transform_indices = @transform_1, window_bounds = array<i64: 3, 512>}, {transform_indices = @transform_2, window_bounds = array<i64: 2, 512>}, {transform_indices = @transform_3, window_bounds = array<i64: 1, 256>}, {pipeline_mode = #tpu.pipeline_mode<synchronous>, transform_indices = @transform_4, window_bounds = array<i64: 1, 128>}]} {
    %c0_i32 = arith.constant 0 : i32
    %0 = arith.addi %c0_i32, %arg0 : i32
    %c0_i32_0 = arith.constant 0 : i32
    %1 = arith.cmpi eq, %arg0, %c0_i32_0 : i32
    %2 = arith.extui %1 : i1 to i32
    %c0_i32_1 = arith.constant 0 : i32
    %3 = arith.cmpi ne, %2, %c0_i32_1 : i32
    scf.if %3 {
      %cst = arith.constant 0.000000e+00 : f32
      %16 = vector.broadcast %cst : f32 to vector<8x512xf32>
      %c0 = arith.constant 0 : index
      %c0_9 = arith.constant 0 : index
      %17 = vector.load %arg7[%c0, %c0_9] : memref<8x512xf32, #tpu.memory_space<vmem>>, vector<8x512xf32>
      tpu.vector_store %arg7[%c0, %c0_9], %16 {strides = array<i32>} : memref<8x512xf32, #tpu.memory_space<vmem>>, vector<8x512xf32>,
      %cst_10 = arith.constant 0.000000e+00 : f32
      %18 = vector.broadcast %cst_10 : f32 to vector<8x512xf32>
      %c0_11 = arith.constant 0 : index
      %c0_12 = arith.constant 0 : index
      %19 = vector.load %arg6[%c0_11, %c0_12] : memref<8x512xf32, #tpu.memory_space<vmem>>, vector<8x512xf32>
      tpu.vector_store %arg6[%c0_11, %c0_12], %18 {strides = array<i32>} : memref<8x512xf32, #tpu.memory_space<vmem>>, vector<8x512xf32>,
    } else {
    }
    %c1_i32 = arith.constant 1 : i32
    %4 = arith.cmpi slt, %0, %c1_i32 : i32
    %5 = arith.extui %4 : i1 to i32
    %c0_i32_2 = arith.constant 0 : i32
    %6 = arith.cmpi ne, %5, %c0_i32_2 : i32
    scf.if %6 {
      %c0 = arith.constant 0 : index
      %c0_9 = arith.constant 0 : index
      %16 = vector.load %arg1[%c0, %c0_9] : memref<3x512xf32, #tpu.memory_space<vmem>>, vector<3x512xf32>
      %cst = arith.constant 0.000000e+00 : f32
      %cst_10 = arith.constant 1.000000e+00 : f32
      %17 = vector.broadcast %cst : f32 to vector<3x512xf32>
      %18 = arith.maximumf %17, %16 : vector<3x512xf32>
      %19 = vector.broadcast %cst_10 : f32 to vector<3x512xf32>
      %20 = arith.minimumf %19, %18 : vector<3x512xf32>
      %c0_11 = arith.constant 0 : index
      %c0_12 = arith.constant 0 : index
      %21 = vector.load %arg2[%c0_11, %c0_12] : memref<3x512xf32, #tpu.memory_space<vmem>>, vector<3x512xf32>
      %22 = arith.subf %20, %21 : vector<3x512xf32>
      %23 = arith.mulf %22, %22 : vector<3x512xf32>
      %cst_13 = arith.constant dense<0.000000e+00> : vector<512xf32>
      %24 = vector.multi_reduction <add>, %23, %cst_13 [0] : vector<3x512xf32> to vector<512xf32>
      %25 = vector.shape_cast %24 : vector<512xf32> to vector<1x512xf32>
      %26 = tpu.iota {dimensions = array<i32: 0>} : vector<8x512xi32>
      %c0_i32_14 = arith.constant 0 : i32
      %27 = vector.broadcast %c0_i32_14 : i32 to vector<8x512xi32>
      %28 = arith.cmpi eq, %26, %27 : vector<8x512xi32>
      %cst_15 = arith.constant 0.000000e+00 : f32
      %29 = vector.shape_cast %25 : vector<1x512xf32> to vector<1x512xf32>
      %30 = vector.broadcast %29 : vector<1x512xf32> to vector<8x512xf32>
      %31 = vector.broadcast %cst_15 : f32 to vector<8x512xf32>
      %32 = arith.select %28, %30, %31 : vector<8x512xi1>, vector<8x512xf32>
      %c0_16 = arith.constant 0 : index
      %c0_17 = arith.constant 0 : index
      %33 = vector.load %arg6[%c0_16, %c0_17] : memref<8x512xf32, #tpu.memory_space<vmem>>, vector<8x512xf32>
      %34 = arith.addf %33, %32 : vector<8x512xf32>
      %c0_18 = arith.constant 0 : index
      %c0_19 = arith.constant 0 : index
      %35 = vector.load %arg6[%c0_18, %c0_19] : memref<8x512xf32, #tpu.memory_space<vmem>>, vector<8x512xf32>
      tpu.vector_store %arg6[%c0_18, %c0_19], %34 {strides = array<i32>} : memref<8x512xf32, #tpu.memory_space<vmem>>, vector<8x512xf32>,
    } else {
    }
    %c1_i32_3 = arith.constant 1 : i32
    %7 = arith.cmpi slt, %0, %c1_i32_3 : i32
    %8 = arith.extui %7 : i1 to i32
    %c0_i32_4 = arith.constant 0 : i32
    %9 = arith.cmpi ne, %8, %c0_i32_4 : i32
    scf.if %9 {
      %c0 = arith.constant 0 : index
      %c0_9 = arith.constant 0 : index
      %16 = vector.load %arg3[%c0, %c0_9] : memref<2x512xf32, #tpu.memory_space<vmem>>, vector<2x512xf32>
      %17 = math.log %16 : vector<2x512xf32>
      %cst = arith.constant dense<0.000000e+00> : vector<512xf32>
      %18 = vector.multi_reduction <add>, %17, %cst [0] : vector<2x512xf32> to vector<512xf32>
      %19 = vector.shape_cast %18 : vector<512xf32> to vector<1x512xf32>
      %20 = tpu.iota {dimensions = array<i32: 0>} : vector<8x512xi32>
      %c0_i32_10 = arith.constant 0 : i32
      %21 = vector.broadcast %c0_i32_10 : i32 to vector<8x512xi32>
      %22 = arith.cmpi eq, %20, %21 : vector<8x512xi32>
      %cst_11 = arith.constant 0.000000e+00 : f32
      %23 = vector.shape_cast %19 : vector<1x512xf32> to vector<1x512xf32>
      %24 = vector.broadcast %23 : vector<1x512xf32> to vector<8x512xf32>
      %25 = vector.broadcast %cst_11 : f32 to vector<8x512xf32>
      %26 = arith.select %22, %24, %25 : vector<8x512xi1>, vector<8x512xf32>
      %c0_12 = arith.constant 0 : index
      %c0_13 = arith.constant 0 : index
      %27 = vector.load %arg7[%c0_12, %c0_13] : memref<8x512xf32, #tpu.memory_space<vmem>>, vector<8x512xf32>
      %28 = arith.addf %27, %26 : vector<8x512xf32>
      %c0_14 = arith.constant 0 : index
      %c0_15 = arith.constant 0 : index
      %29 = vector.load %arg7[%c0_14, %c0_15] : memref<8x512xf32, #tpu.memory_space<vmem>>, vector<8x512xf32>
      tpu.vector_store %arg7[%c0_14, %c0_15], %28 {strides = array<i32>} : memref<8x512xf32, #tpu.memory_space<vmem>>, vector<8x512xf32>,
    } else {
    }
    %c1_i32_5 = arith.constant 1 : i32
    %10 = arith.cmpi slt, %0, %c1_i32_5 : i32
    %11 = arith.extui %10 : i1 to i32
    %c0_i32_6 = arith.constant 0 : i32
    %12 = arith.cmpi ne, %11, %c0_i32_6 : i32
    scf.if %12 {
      %c0 = arith.constant 0 : index
      %c0_9 = arith.constant 0 : index
      %16 = vector.load %arg4[%c0, %c0_9] : memref<1x256xf32, #tpu.memory_space<vmem>>, vector<1x256xf32>
      %17 = math.log %16 : vector<1x256xf32>
      %18 = tpu.iota {dimensions = array<i32: 0>} : vector<8x256xi32>
      %c0_i32_10 = arith.constant 0 : i32
      %19 = vector.broadcast %c0_i32_10 : i32 to vector<8x256xi32>
      %20 = arith.cmpi eq, %18, %19 : vector<8x256xi32>
      %cst = arith.constant 0.000000e+00 : f32
      %21 = vector.shape_cast %17 : vector<1x256xf32> to vector<1x256xf32>
      %22 = vector.broadcast %21 : vector<1x256xf32> to vector<8x256xf32>
      %23 = vector.broadcast %cst : f32 to vector<8x256xf32>
      %24 = arith.select %20, %22, %23 : vector<8x256xi1>, vector<8x256xf32>
      %c0_11 = arith.constant 0 : index
      %c0_12 = arith.constant 0 : index
      %25 = vector.load %arg7[%c0_11, %c0_12] : memref<8x512xf32, #tpu.memory_space<vmem>>, vector<8x256xf32>
      %26 = arith.addf %25, %24 : vector<8x256xf32>
      %c0_13 = arith.constant 0 : index
      %c0_14 = arith.constant 0 : index
      %27 = vector.load %arg7[%c0_13, %c0_14] : memref<8x512xf32, #tpu.memory_space<vmem>>, vector<8x256xf32>
      tpu.vector_store %arg7[%c0_13, %c0_14], %26 {strides = array<i32>} : memref<8x512xf32, #tpu.memory_space<vmem>>, vector<8x256xf32>,
    } else {
    }
    %c0_i32_7 = arith.constant 0 : i32
    %13 = arith.cmpi eq, %arg0, %c0_i32_7 : i32
    %14 = arith.extui %13 : i1 to i32
    %c0_i32_8 = arith.constant 0 : i32
    %15 = arith.cmpi ne, %14, %c0_i32_8 : i32
    scf.if %15 {
      %c0 = arith.constant 0 : index
      %c0_9 = arith.constant 0 : index
      %16 = vector.load %arg7[%c0, %c0_9] : memref<8x512xf32, #tpu.memory_space<vmem>>, vector<8x512xf32>
      %17 = vector.shape_cast %16 : vector<8x512xf32> to vector<1x8x512xf32>
      %cst = arith.constant dense<0.000000e+00> : vector<1xf32>
      %18 = vector.multi_reduction <add>, %17, %cst [1, 2] : vector<1x8x512xf32> to vector<1xf32>
      %19 = vector.shape_cast %18 : vector<1xf32> to vector<1x1x1xf32>
      %20 = vector.extract %19[0, 0, 0] : f32 from vector<1x1x1xf32>
      %c0_10 = arith.constant 0 : index
      %c0_11 = arith.constant 0 : index
      %21 = vector.load %arg6[%c0_10, %c0_11] : memref<8x512xf32, #tpu.memory_space<vmem>>, vector<8x512xf32>
      %22 = vector.shape_cast %21 : vector<8x512xf32> to vector<1x8x512xf32>
      %cst_12 = arith.constant dense<0.000000e+00> : vector<1xf32>
      %23 = vector.multi_reduction <add>, %22, %cst_12 [1, 2] : vector<1x8x512xf32> to vector<1xf32>
      %24 = vector.shape_cast %23 : vector<1xf32> to vector<1x1x1xf32>
      %25 = vector.extract %24[0, 0, 0] : f32 from vector<1x1x1xf32>
      %26 = tpu.iota {dimensions = array<i32: 1>} : vector<1x128xi32>
      %c0_i32_13 = arith.constant 0 : i32
      %27 = vector.broadcast %c0_i32_13 : i32 to vector<1x128xi32>
      %28 = arith.cmpi eq, %26, %27 : vector<1x128xi32>
      %c1_i32_14 = arith.constant 1 : i32
      %29 = vector.broadcast %c1_i32_14 : i32 to vector<1x128xi32>
      %30 = arith.cmpi eq, %26, %29 : vector<1x128xi32>
      %cst_15 = arith.constant 0.000000e+00 : f32
      %31 = vector.broadcast %20 : f32 to vector<1x128xf32>
      %32 = vector.broadcast %cst_15 : f32 to vector<1x128xf32>
      %33 = arith.select %30, %31, %32 : vector<1x128xi1>, vector<1x128xf32>
      %34 = vector.broadcast %25 : f32 to vector<1x128xf32>
      %35 = arith.select %28, %34, %33 : vector<1x128xi1>, vector<1x128xf32>
      %c0_16 = arith.constant 0 : index
      %c0_17 = arith.constant 0 : index
      %36 = vector.load %arg5[%c0_16, %c0_17] : memref<1x128xf32, #tpu.memory_space<vmem>>, vector<1x128xf32>
      tpu.vector_store %arg5[%c0_16, %c0_17], %35 {strides = array<i32>} : memref<1x128xf32, #tpu.memory_space<vmem>>, vector<1x128xf32>,
    } else {
    }
    return
  }
  func.func @transform_0(%arg0: i32) -> (i32, i32) {
    %c0_i32 = arith.constant 0 : i32
    %0 = arith.minsi %arg0, %c0_i32 : i32
    %c0_i32_0 = arith.constant 0 : i32
    %c0_i32_1 = arith.constant 0 : i32
    return %0, %c0_i32_0 : i32, i32
  }
  func.func @transform_1(%arg0: i32) -> (i32, i32) {
    %c0_i32 = arith.constant 0 : i32
    %0 = arith.minsi %arg0, %c0_i32 : i32
    %c0_i32_0 = arith.constant 0 : i32
    %c0_i32_1 = arith.constant 0 : i32
    return %0, %c0_i32_0 : i32, i32
  }
  func.func @transform_2(%arg0: i32) -> (i32, i32) {
    %c0_i32 = arith.constant 0 : i32
    %0 = arith.minsi %arg0, %c0_i32 : i32
    %c0_i32_0 = arith.constant 0 : i32
    %c0_i32_1 = arith.constant 0 : i32
    return %0, %c0_i32_0 : i32, i32
  }
  func.func @transform_3(%arg0: i32) -> (i32, i32) {
    %c0_i32 = arith.constant 0 : i32
    %0 = arith.minsi %arg0, %c0_i32 : i32
    %c0_i32_0 = arith.constant 0 : i32
    %c0_i32_1 = arith.constant 0 : i32
    return %0, %c0_i32_0 : i32, i32
  }
  func.func @transform_4(%arg0: i32) -> (i32, i32) {
    %c0_i32 = arith.constant 0 : i32
    %c0_i32_0 = arith.constant 0 : i32
    %c0_i32_1 = arith.constant 0 : i32
    return %c0_i32, %c0_i32_0 : i32, i32
  }
}

</mosaic_0001>

<llo_original>
// kernel: rate_distortion_loss.1
$region0: #{rate_distortion_loss.1}
  #allocation0 [shape = 'u32[]', space=smem, size = 0x4, offset = 0x4, fixed_abs, tag = 'smem constant byte address 0x4 - core index']
  #allocation1 [shape = 'u32[144,128]{1,0:T(1,128)}', space=vmem, size = 0x12000, scoped, tag = 'internal scratch']
  #allocation2 [shape = 'f32[8,512]{1,0:T(8,128)}', space=vmem, size = 0x4000, scoped, tag = 'scratch operand']
  #allocation3 [shape = 'f32[8,512]{1,0:T(8,128)}', space=vmem, size = 0x4000, scoped, tag = 'scratch operand']
  %s0 = inlined_call_operand.vmem [shape: f32[3,512], index: 0, kind: input, shape index: {}]
  %s1 = inlined_call_operand.vmem [shape: f32[3,512], index: 1, kind: input, shape index: {}]
  %s2 = inlined_call_operand.vmem [shape: f32[2,512], index: 2, kind: input, shape index: {}]
  %s3 = inlined_call_operand.vmem [shape: f32[1,256], index: 3, kind: input, shape index: {}]
  %s4 = inlined_call_operand.vmem [shape: f32[1,128], index: 4, kind: output, shape index: {}]
  %s5 = sld [smem:[#allocation0]]
  $region38: #{rate_distortion_loss.1} parent=0
    _
  %s7 = ssub.s32 1, %s5
  %s8 = scalar_select 0, %s7, %s5
  // Predicated region
  $region2: #{rate_distortion_loss.1} parent=0 // pred_check
    _
  $region3: #{rate_distortion_loss.1} parent=0 // pred_check_branch
    %10 = sbr.rel (0) target = $region5
  $region4: #{rate_distortion_loss.1} parent=0 // pred_region
    _
  $region5: #{rate_distortion_loss.1} parent=0 // pred_fallthru
    _
  // Predicated region
  $region6: #{rate_distortion_loss.1} parent=0 // pred_check
    _
  $region7: #{rate_distortion_loss.1} parent=0 // pred_check_branch
    %12 = sbr.rel (0) target = $region9
  $region8: #{rate_distortion_loss.1} parent=0 // pred_region
    _
  $region9: #{rate_distortion_loss.1} parent=0 // pred_fallthru
    _
  // Predicated region
  $region10: #{rate_distortion_loss.1} parent=0 // pred_check
    _
  $region11: #{rate_distortion_loss.1} parent=0 // pred_check_branch
    %14 = sbr.rel (0) target = $region13
  $region12: #{rate_distortion_loss.1} parent=0 // pred_region
    _
  $region13: #{rate_distortion_loss.1} parent=0 // pred_fallthru
    _
  // Predicated region
  $region14: #{rate_distortion_loss.1} parent=0 // pred_check
    _
  $region15: #{rate_distortion_loss.1} parent=0 // pred_check_branch
    %16 = sbr.rel (0) target = $region17
  $region16: #{rate_distortion_loss.1} parent=0 // pred_region
    _
  $region17: #{rate_distortion_loss.1} parent=0 // pred_fallthru
    _
  %p17 = scmp.eq.s32.totalorder 0, 0
  // Predicated region
  $region18: #{rate_distortion_loss.1} parent=0 // pred_check
    %p18 = pneg %p17
  $region19: #{rate_distortion_loss.1} parent=0 // pred_check_branch
    %20 = sbr.rel (%p18) target = $region21
  $region20: #{rate_distortion_loss.1} parent=0 // pred_region
    %21 = vst [vmem:[#allocation3] sm:$0xff] 0.0
    %22 = vst [vmem:[#allocation3 + $0x8] sm:$0xff] 0.0
    %23 = vst [vmem:[#allocation3 + $0x10] sm:$0xff] 0.0
    %24 = vst [vmem:[#allocation3 + $0x18] sm:$0xff] 0.0
    %25 = vst [vmem:[#allocation2] sm:$0xff] 0.0
    %26 = vst [vmem:[#allocation2 + $0x8] sm:$0xff] 0.0
    %27 = vst [vmem:[#allocation2 + $0x10] sm:$0xff] 0.0
    %28 = vst [vmem:[#allocation2 + $0x18] sm:$0xff] 0.0
  $region21: #{rate_distortion_loss.1} parent=0 // pred_fallthru
    _
  %p29 = scmp.lt.s32.totalorder 0, 1
  // Predicated region
  $region22: #{rate_distortion_loss.1} parent=0 // pred_check
    %p30 = pneg %p29
  $region23: #{rate_distortion_loss.1} parent=0 // pred_check_branch
    %32 = sbr.rel (%p30) target = $region25
  $region24: #{rate_distortion_loss.1} parent=0 // pred_region
    %v33 = vld [vmem:[%s0] sm:$0x77]
    %v34 = vld [vmem:[%s0 + $0x8] sm:$0x77]
    %v35 = vmax.f32 %v33, 0.0
    %v36 = vmax.f32 %v34, 0.0
    %v37 = vmin.f32 %v35, 1.0
    %v38 = vmin.f32 %v36, 1.0
    %v39 = vld [vmem:[%s1] sm:$0x77]
    %v40 = vld [vmem:[%s1 + $0x8] sm:$0x77]
    %v41 = vsub.f32 %v37, %v39
    %v42 = vsub.f32 %v38, %v40
    %v43 = vmul.f32 %v41, %v41
    %v44 = vmul.f32 %v42, %v42
    %v47 = vcombine.high %v43, %v43
    %v48 = vcombine.high %v44, %v44
    %vm51 = vcmask 1042432
    %v52 = vsel %vm51, %v43, 0.0
    %v53 = vrot.slane %v52, 4
    %v54 = vadd.f32 %v52, %v53
    %v55 = vrot.slane %v54, 2
    %v56 = vadd.f32 %v54, %v55
    %v57 = vrot.slane %v56, 1
    %v58 = vadd.f32 %v56, %v57
    %v59 = vsel %vm51, %v47, 0.0
    %v60 = vrot.slane %v59, 4
    %v61 = vadd.f32 %v59, %v60
    %v62 = vrot.slane %v61, 2
    %v63 = vadd.f32 %v61, %v62
    %v64 = vrot.slane %v63, 1
    %v65 = vadd.f32 %v63, %v64
    %v66 = vsel %vm51, %v44, 0.0
    %v67 = vrot.slane %v66, 4
    %v68 = vadd.f32 %v66, %v67
    %v69 = vrot.slane %v68, 2
    %v70 = vadd.f32 %v68, %v69
    %v71 = vrot.slane %v70, 1
    %v72 = vadd.f32 %v70, %v71
    %v73 = vsel %vm51, %v48, 0.0
    %v74 = vrot.slane %v73, 4
    %v75 = vadd.f32 %v73, %v74
    %v76 = vrot.slane %v75, 2
    %v77 = vadd.f32 %v75, %v76
    %v78 = vrot.slane %v77, 1
    %v79 = vadd.f32 %v77, %v78
    %v80 = vlaneseq
    %v81 = vshrl.u32 %v80, 7
    %vm82 = vcmp.eq.s32.totalorder %v81, 0
    %v83 = vsel %vm82, %v58, 0.0
    %v84 = vsel %vm82, %v65, 0.0
    %v85 = vsel %vm82, %v72, 0.0
    %v86 = vsel %vm82, %v79, 0.0
    %v87 = vld [vmem:[#allocation2] sm:$0xff]
    %v88 = vld [vmem:[#allocation2 + $0x8] sm:$0xff]
    %v89 = vld [vmem:[#allocation2 + $0x10] sm:$0xff]
    %v90 = vld [vmem:[#allocation2 + $0x18] sm:$0xff]
    %v91 = vadd.f32 %v87, %v83
    %v92 = vadd.f32 %v88, %v84
    %v93 = vadd.f32 %v89, %v85
    %v94 = vadd.f32 %v90, %v86
    %95 = vst [vmem:[#allocation2] sm:$0xff] %v91
    %96 = vst [vmem:[#allocation2 + $0x8] sm:$0xff] %v92
    %97 = vst [vmem:[#allocation2 + $0x10] sm:$0xff] %v93
    %98 = vst [vmem:[#allocation2 + $0x18] sm:$0xff] %v94
    %v99 = vld [vmem:[%s2] sm:$0xff]
    %v100 = vlog2.pop %v99
    %v101 = vmul.f32 %v100, 0.6931472
    %v103 = vcombine.high %v101, %v101
    %v105 = vunpack.c.l.s4 1983009808
    %v106 = vunpack.c.0.s8 %v105
    %v107 = vlaneseq
    %v108 = vshrl.u32 %v107, 7
    %v109 = vsub.s32 %v106, %v108
    %v110 = vrot.slane %v101, %v109
    %v112 = vunpack.c.l.s4 1983009808
    %v113 = vunpack.c.0.s8 %v112
    %v114 = vlaneseq
    %v115 = vshrl.u32 %v114, 7
    %v116 = vsub.s32 %v113, %v115
    %v117 = vrot.slane %v103, %v116
    %v118 = vcombine.high %v110, %v110
    %v119 = vcombine.high %v117, %v117
    %vm124 = vcmask 1041408
    %v125 = vsel %vm124, %v110, 0.0
    %v126 = vrot.slane %v125, 4
    %v127 = vadd.f32 %v125, %v126
    %v128 = vrot.slane %v127, 2
    %v129 = vadd.f32 %v127, %v128
    %v130 = vrot.slane %v129, 1
    %v131 = vadd.f32 %v129, %v130
    %v132 = vsel %vm124, %v118, 0.0
    %v133 = vrot.slane %v132, 4
    %v134 = vadd.f32 %v132, %v133
    %v135 = vrot.slane %v134, 2
    %v136 = vadd.f32 %v134, %v135
    %v137 = vrot.slane %v136, 1
    %v138 = vadd.f32 %v136, %v137
    %v139 = vsel %vm124, %v117, 0.0
    %v140 = vrot.slane %v139, 4
    %v141 = vadd.f32 %v139, %v140
    %v142 = vrot.slane %v141, 2
    %v143 = vadd.f32 %v141, %v142
    %v144 = vrot.slane %v143, 1
    %v145 = vadd.f32 %v143, %v144
    %v146 = vsel %vm124, %v119, 0.0
    %v147 = vrot.slane %v146, 4
    %v148 = vadd.f32 %v146, %v147
    %v149 = vrot.slane %v148, 2
    %v150 = vadd.f32 %v148, %v149
    %v151 = vrot.slane %v150, 1
    %v152 = vadd.f32 %v150, %v151
    %v153 = vsel %vm82, %v131, 0.0
    %v154 = vsel %vm82, %v138, 0.0
    %v155 = vsel %vm82, %v145, 0.0
    %v156 = vsel %vm82, %v152, 0.0
    %v157 = vld [vmem:[#allocation3] sm:$0xff]
    %v158 = vld [vmem:[#allocation3 + $0x8] sm:$0xff]
    %v159 = vld [vmem:[#allocation3 + $0x10] sm:$0xff]
    %v160 = vld [vmem:[#allocation3 + $0x18] sm:$0xff]
    %v161 = vadd.f32 %v157, %v153
    %v162 = vadd.f32 %v158, %v154
    %v163 = vadd.f32 %v159, %v155
    %v164 = vadd.f32 %v160, %v156
    %165 = vst [vmem:[#allocation3] sm:$0xff] %v161
    %166 = vst [vmem:[#allocation3 + $0x8] sm:$0xff] %v162
    %167 = vst [vmem:[#allocation3 + $0x10] sm:$0xff] %v163
    %168 = vst [vmem:[#allocation3 + $0x18] sm:$0xff] %v164
    %v169 = vld [vmem:[%s3] sm:$0x3]
    %v170 = vlog2.pop %v169
    %v171 = vmul.f32 %v170, 0.6931472
    %v173 = vlaneseq
    %v174 = vshrl.u32 %v173, 7
    %v175 = vsub.s32 0, %v174
    %v176 = vrot.slane %v171, %v175
    %v177 = vlaneseq
    %v178 = vshrl.u32 %v177, 7
    %v179 = vsub.s32 1, %v178
    %v180 = vrot.slane %v171, %v179
    %v183 = vsel %vm82, %v176, 0.0
    %v184 = vsel %vm82, %v180, 0.0
    %v185 = vld [vmem:[#allocation3] sm:$0xff]
    %v186 = vld [vmem:[#allocation3 + $0x8] sm:$0xff]
    %v187 = vadd.f32 %v185, %v183
    %v188 = vadd.f32 %v186, %v184
    %189 = vst [vmem:[#allocation3] sm:$0xff] %v187
    %190 = vst [vmem:[#allocation3 + $0x8] sm:$0xff] %v188
  $region25: #{rate_distortion_loss.1} parent=0 // pred_fallthru
    _
  // Predicated region
  $region26: #{rate_distortion_loss.1} parent=0 // pred_check
    %p191 = pneg %p17
  $region27: #{rate_distortion_loss.1} parent=0 // pred_check_branch
    %193 = sbr.rel (%p191) target = $region29
  $region28: #{rate_distortion_loss.1} parent=0 // pred_region
    %v194 = vld [vmem:[#allocation3] sm:$0xff]
    %v195 = vld [vmem:[#allocation3 + $0x8] sm:$0xff]
    %v196 = vld [vmem:[#allocation3 + $0x10] sm:$0xff]
    %v197 = vld [vmem:[#allocation3 + $0x18] sm:$0xff]
    %v198 = vadd.f32 %v194, %v195
    %v199 = vadd.f32 %v198, %v196
    %v200 = vadd.f32 %v199, %v197
    %201 = vadd.xlane.f32.xlu0 %v200
    %v202 = vpop.xlane.xlu0 %201
    %v203 = vrot.slane %v202, 4
    %v204 = vadd.f32 %v202, %v203
    %v205 = vrot.slane %v204, 2
    %v206 = vadd.f32 %v204, %v205
    %v207 = vrot.slane %v206, 1
    %v208 = vadd.f32 %v206, %v207
    %s209 = vtos %v208
    %v210 = vld [vmem:[#allocation2] sm:$0xff]
    %v211 = vld [vmem:[#allocation2 + $0x8] sm:$0xff]
    %v212 = vld [vmem:[#allocation2 + $0x10] sm:$0xff]
    %v213 = vld [vmem:[#allocation2 + $0x18] sm:$0xff]
    %v214 = vadd.f32 %v210, %v211
    %v215 = vadd.f32 %v214, %v212
    %v216 = vadd.f32 %v215, %v213
    %217 = vadd.xlane.f32.xlu0 %v216
    %v218 = vpop.xlane.xlu0 %217
    %v219 = vrot.slane %v218, 4
    %v220 = vadd.f32 %v218, %v219
    %v221 = vrot.slane %v220, 2
    %v222 = vadd.f32 %v220, %v221
    %v223 = vrot.slane %v222, 1
    %v224 = vadd.f32 %v222, %v223
    %s225 = vtos %v224
    %v226 = vlaneseq
    %v227 = vand.u32 %v226, 127
    %vm228 = vcmp.eq.s32.totalorder %v227, 0
    %vm229 = vcmp.eq.s32.totalorder %v227, 1
    %v230 = vstv %s209
    %v231 = vsel %vm229, %v230, 0.0
    %v232 = vstv %s225
    %v233 = vsel %vm228, %v232, %v231
    %234 = vst [vmem:[%s4] sm:$0x1] %v233
  $region29: #{rate_distortion_loss.1} parent=0 // pred_fallthru
    _
  // Predicated region
  $region30: #{rate_distortion_loss.1} parent=0 // pred_check
    _
  $region31: #{rate_distortion_loss.1} parent=0 // pred_check_branch
    %236 = sbr.rel (0) target = $region33
  $region32: #{rate_distortion_loss.1} parent=0 // pred_region
    _
  $region33: #{rate_distortion_loss.1} parent=0 // pred_fallthru
    _
  // Predicated region
  $region34: #{rate_distortion_loss.1} parent=0 // pred_check
    _
  $region35: #{rate_distortion_loss.1} parent=0 // pred_check_branch
    %238 = sbr.rel (0) target = $region37
  $region36: #{rate_distortion_loss.1} parent=0 // pred_region
    _
  $region37: #{rate_distortion_loss.1} parent=0 // pred_fallthru
    _

</llo_original>
